<compile_context>
chip_gen: v7x
topology: tpu7x:2x2x1
jax: 0.10.0
libtpu: 0.0.40
codegen_flags: <defaults>
</compile_context>

<pallas_src>
import jax
import jax.numpy as jnp
from jax.experimental import pallas as pl
from jax.experimental.pallas import tpu as pltpu

_LANE_WIDTHS = (1024, 512, 256, 128)   # widest lane-dense width dividing n wins
_TARGET_BLOCK_BYTES = 4 << 20          # ~4 MiB blocks: near-peak HBM roofline
_SMALL_N = 1 << 20                     # below ~1M elems, fused XLA add wins


def _add_one_kernel(x_ref, o_ref):
    # Elementwise VPU op on a lane-dense VMEM tile.
    o_ref[...] = x_ref[...] + jnp.asarray(1, dtype=x_ref.dtype)


def add_one(x: jax.Array, *, force_pallas: bool = False,
            block_rows: int | None = None,
            core_parallel: bool = False) -> jax.Array:
    """Pallas equivalent of HelloWorldModule.forward: input + 1."""
    n = x.size

    # Pick the widest lane-dense last dim that divides n exactly (no padding).
    lane = next((w for w in _LANE_WIDTHS if n and n % w == 0), None)

    if lane is None or n == 0 or (n < _SMALL_N and not force_pallas):
        # Misaligned or tiny workloads: a standalone Pallas call would pay a
        # launch plus a dedicated HBM read+write pass (and pad/slice passes for
        # misaligned sizes) — let XLA do / fuse the add instead.
        return x + jnp.asarray(1, x.dtype)

    itemsize = jnp.dtype(x.dtype).itemsize
    sub = max(8, 32 // itemsize)        # sublane multiple (8 f32, 16 bf16, 32 i8)

    flat = x.reshape(-1)                # contiguous view, no extra HBM pass
    rows = n // lane
    x2d = flat.reshape(rows, lane)

    # Block rows: full extent if it fits one block (always a legal block shape),
    # otherwise ~4 MiB worth of rows rounded to the sublane multiple. Uneven
    # edge blocks are handled by Pallas with masked writes (safe elementwise).
    if block_rows is None:
        block_rows = max(sub, _TARGET_BLOCK_BYTES // (lane * itemsize))
    if rows <= block_rows:
        tr = rows
    else:
        tr = max(sub, (block_rows // sub) * sub)
    grid = (pl.cdiv(rows, tr),)

    # Working set: (in + out) x double-buffered = 4 x block bytes, plus
    # headroom for Mosaic internal scratch. Capped comfortably under v7x's
    # 64 MiB physical VMEM; v5e/v6e (128 MiB) have even more slack.
    block_bytes = tr * lane * itemsize
    vmem_limit = min(48 << 20, 4 * block_bytes + (8 << 20))

    # TODO(synk): on v7x, enable core_parallel=True (pltpu.CORE_PARALLEL) so the
    # row grid is actually sharded across both TensorCores (~2x streaming BW);
    # plain "parallel" is kept as the portable default here.
    sem = pltpu.CORE_PARALLEL if core_parallel else "parallel"

    y2d = pl.pallas_call(
        _add_one_kernel,
        out_shape=jax.ShapeDtypeStruct((rows, lane), x.dtype),
        grid=grid,
        in_specs=[pl.BlockSpec((tr, lane), lambda i: (i, 0))],
        out_specs=pl.BlockSpec((tr, lane), lambda i: (i, 0)),
        compiler_params=pltpu.CompilerParams(
            dimension_semantics=(sem,),
            vmem_limit_bytes=vmem_limit,
        ),
    )(x2d)

    return y2d.reshape(x.shape)


if __name__ == "__main__":
    key = jax.random.PRNGKey(0)
    k1, k2, k3 = jax.random.split(key, 3)

    # Toy NCHW input matching the module spec (2, 4, 16, 16).
    # 2048 elements -> lane width 1024, single-block Pallas path (forced).
    x_small = jax.random.normal(k1, (2, 4, 16, 16), dtype=jnp.float32)
    y_small = add_one(x_small, force_pallas=True)
    jax.block_until_ready(y_small)
    assert y_small.shape == x_small.shape and y_small.dtype == x_small.dtype
    assert jnp.allclose(y_small, x_small + 1.0), "mismatch vs reference x + 1"

    # Larger input; shrink block_rows to exercise the multi-block (grid > 1)
    # pipelined path without allocating a huge array.
    x_big = jax.random.normal(k2, (8, 8, 128, 128), dtype=jnp.float32)
    y_big = add_one(x_big, force_pallas=True, block_rows=256)
    jax.block_until_ready(y_big)
    assert jnp.allclose(y_big, x_big + 1.0), "mismatch vs reference x + 1 (big)"

    # Misaligned size (not a multiple of 128) -> jnp fallback path (no pad/slice).
    x_odd = jax.random.normal(k3, (2, 3, 5, 7), dtype=jnp.float32)
    y_odd = add_one(x_odd)
    jax.block_until_ready(y_odd)
    assert jnp.allclose(y_odd, x_odd + 1.0), "mismatch vs reference x + 1 (odd)"

    print("KERNEL_OK")
</pallas_src>

<mosaic_0001>
module attributes {stable_mosaic.version = 11 : i64} {
  func.func @_add_one_kernel(%arg0: i32, %arg1: memref<2x1024xf32, #tpu.memory_space<vmem>>, %arg2: memref<2x1024xf32, #tpu.memory_space<vmem>>) attributes {dimension_semantics = [#tpu.dimension_semantics<parallel>], iteration_bounds = array<i64: 1>, scalar_prefetch = 0 : i64, scratch_operands = 0 : i64, tpu.core_type = #tpu.core_type<tc>, window_params = [{transform_indices = @transform_0, window_bounds = array<i64: 2, 1024>}, {transform_indices = @transform_1, window_bounds = array<i64: 2, 1024>}]} {
    %c0 = arith.constant 0 : index
    %c0_0 = arith.constant 0 : index
    %0 = vector.load %arg1[%c0, %c0_0] : memref<2x1024xf32, #tpu.memory_space<vmem>>, vector<2x1024xf32>
    %cst = arith.constant 1.000000e+00 : f32
    %1 = vector.broadcast %cst : f32 to vector<2x1024xf32>
    %2 = arith.addf %0, %1 : vector<2x1024xf32>
    %c0_1 = arith.constant 0 : index
    %c0_2 = arith.constant 0 : index
    %3 = vector.load %arg2[%c0_1, %c0_2] : memref<2x1024xf32, #tpu.memory_space<vmem>>, vector<2x1024xf32>
    tpu.vector_store %arg2[%c0_1, %c0_2], %2 {strides = array<i32>} : memref<2x1024xf32, #tpu.memory_space<vmem>>, vector<2x1024xf32>,
    return
  }
  func.func @transform_0(%arg0: i32) -> (i32, i32) {
    %c0_i32 = arith.constant 0 : i32
    %c0_i32_0 = arith.constant 0 : i32
    return %arg0, %c0_i32 : i32, i32
  }
  func.func @transform_1(%arg0: i32) -> (i32, i32) {
    %c0_i32 = arith.constant 0 : i32
    %c0_i32_0 = arith.constant 0 : i32
    return %arg0, %c0_i32 : i32, i32
  }
}

</mosaic_0001>

<llo_original>
// kernel: tpu_custom_call.1
$region0: #{tpu_custom_call.1}
  #allocation0 [shape = 'u32[]', space=smem, size = 0x4, offset = 0x4, fixed_abs, tag = 'smem constant byte address 0x4 - core index']
  #allocation1 [shape = 'u32[144,128]{1,0:T(1,128)}', space=vmem, size = 0x12000, scoped, tag = 'internal scratch']
  %s0 = inlined_call_operand.hbm [shape: f32[2,1024], index: 0, kind: input, shape index: {}]
  %s1 = inlined_call_operand.hbm [shape: f32[2,1024], index: 1, kind: output, shape index: {}]
  %s2 = sld [smem:[#allocation0]]
  $region18: #{tpu_custom_call.1} parent=0
    _
  %s4 = ssub.s32 1, %s2
  %s5 = scalar_select 0, %s4, %s2
  $region1: #{tpu_custom_call.1} parent=0
    #allocation2 [shape = 'u8[8192]{0}', space=vmem, size = 0x2000, scoped, tag = 'input window, operand 0, single buffered']
    #allocation3 [shape = 's32[1]{0}', space=sflag, size = 0x4, scoped, tag = 'scoped memory for tpu_custom_call.1']
    #allocation4 [shape = 's32[1]{0}', space=sflag, size = 0x4, scoped, tag = 'scoped memory for tpu_custom_call.1']
    #allocation5 [shape = 'u8[8192]{0}', space=vmem, size = 0x2000, scoped, tag = 'output window, operand 0, single buffered']
    %6 = vsyncpa [#allocation3], 0
    %7 = vsyncpa [#allocation4], 0
    // Predicated region
    $region2: #{tpu_custom_call.1} parent=1 // pred_check
      _
    $region3: #{tpu_custom_call.1} parent=1 // pred_check_branch
      %9 = sbr.rel (0) target = $region5
    $region4: #{tpu_custom_call.1} parent=1 // pred_region
      %s11 = ssub.s32 256, 256
      %12 = vsyncadd [#allocation3], %s11
      %s14 = sshll.u32 [#allocation2], 4
      %s15 = int_to_ptr.vmem [resolvable:$true] %s14
      %17 = dma.hbm_to_vmem [thread:$0]  %s0, 256, %s15, [#allocation3]
    $region5: #{tpu_custom_call.1} parent=1 // pred_fallthru
      _
    // Predicated region
    $region6: #{tpu_custom_call.1} parent=1 // pred_check
      _
    $region7: #{tpu_custom_call.1} parent=1 // pred_check_branch
      %19 = sbr.rel (0) target = $region9
    $region8: #{tpu_custom_call.1} parent=1 // pred_region
      %20 = dma.done [#allocation3], 256
    $region9: #{tpu_custom_call.1} parent=1 // pred_fallthru
      _
    %v21 = vld [vmem:[#allocation2] sm:$0xff]
    %v22 = vld [vmem:[#allocation2 + $0x8] sm:$0xff]
    %v23 = vadd.f32 %v21, 1.0
    %v24 = vadd.f32 %v22, 1.0
    %25 = vst [vmem:[#allocation5] sm:$0xff] %v23
    %26 = vst [vmem:[#allocation5 + $0x8] sm:$0xff] %v24
    // Predicated region
    $region10: #{tpu_custom_call.1} parent=1 // pred_check
      _
    $region11: #{tpu_custom_call.1} parent=1 // pred_check_branch
      %28 = sbr.rel (0) target = $region13
    $region12: #{tpu_custom_call.1} parent=1 // pred_region
      %s30 = ssub.s32 256, 256
      %31 = vsyncadd [#allocation4], %s30
      %s33 = sshll.u32 [#allocation5], 4
      %s34 = int_to_ptr.vmem [resolvable:$true] %s33
      %36 = dma.vmem_to_hbm [thread:$0]  %s34, 256, %s1, [#allocation4]
    $region13: #{tpu_custom_call.1} parent=1 // pred_fallthru
      _
    // Predicated region
    $region14: #{tpu_custom_call.1} parent=1 // pred_check
      _
    $region15: #{tpu_custom_call.1} parent=1 // pred_check_branch
      %38 = sbr.rel (0) target = $region17
    $region16: #{tpu_custom_call.1} parent=1 // pred_region
      %39 = dma.done [#allocation4], 256
    $region17: #{tpu_custom_call.1} parent=1 // pred_fallthru
      _
    %40 = vsyncpa [#allocation3], 1
    %41 = vsyncpa [#allocation4], 1

</llo_original>
